<compile_context>
chip_gen: v6e
topology: v6e:2x2x1
jax: 0.10.0
libtpu: 0.0.40
codegen_flags: <defaults>
</compile_context>

<pallas_src>
import jax
import jax.numpy as jnp
import numpy as np
from jax import lax
from jax.experimental import pallas as pl
from jax.experimental.pallas import tpu as pltpu

# ---------------- sizes (small, consistent with the module's constructor) ----
B = 8          # batch
D_IN = 64      # raw contextual input feature dim (input to the stand-in encoder)
C_OUT = 48     # contextual_output_dim
K = 16         # knowledge_output_dim
E = 32         # encoder_output_dim
OUT = 3        # output_dim (NLI classes)
V = 64         # number of entries in sentence_transe embedding table

# ---------------- packed parameter-slab layout (all row starts 8-aligned) ----
LANES = 128
R_TABLE = 0                  # sentence_transe        [V, K]       rows   0..63
R_WENC = R_TABLE + V         # base_model stand-in    [D_IN, C_OUT] rows  64..127
R_WCC = R_WENC + D_IN        # convert_contextual     [C_OUT, E]   rows 128..175
R_WCV = R_WCC + C_OUT        # converter              [2K, E]      rows 176..207
R_WCB = R_WCV + 2 * K        # combine                [4E, E]      rows 208..335
R_WCLS = R_WCB + 4 * E       # classification         [E, OUT]     rows 336..367
R_BIAS = R_WCLS + E          # bias block (8 rows)                 rows 368..375
ROWS = R_BIAS + 8            # 376 rows x 128 lanes x 4 B = 192.5 KB


def knowledge_model_kernel(x1_ref, idx_ref, p_ref, y_ref):
    f32 = jnp.float32

    # -------- static views into the single packed parameter slab ------------
    table = p_ref[R_TABLE:R_TABLE + V, 0:K]            # [64, 16]
    w_enc = p_ref[R_WENC:R_WENC + D_IN, 0:C_OUT]       # [64, 48]
    w_cc = p_ref[R_WCC:R_WCC + C_OUT, 0:E]              # [48, 32]
    w_cv = p_ref[R_WCV:R_WCV + 2 * K, 0:E]              # [32, 32]
    w_cb = p_ref[R_WCB:R_WCB + 4 * E, 0:E]              # [128, 32]
    w_cls = p_ref[R_WCLS:R_WCLS + E, 0:OUT]             # [32, 3]
    bias_blk = p_ref[R_BIAS:R_BIAS + 8, :]               # [8, 128] aligned load
    b_enc = bias_blk[0:1, 0:C_OUT]
    b_cc = bias_blk[1:2, 0:E]
    b_cv = bias_blk[2:3, 0:E]
    b_cb = bias_blk[3:4, 0:E]
    b_cls = bias_blk[4:5, 0:OUT]

    x1 = x1_ref[...]                                     # [B, D_IN]

    # h1 = self.base_model(x1)
    # TODO(synk): the real contextual encoder is an arbitrary pretrained model;
    # replaced by a deterministic tanh(Linear) stand-in.
    h1 = jnp.tanh(jnp.dot(x1, w_enc, preferred_element_type=f32) + b_enc)

    # h1 = self.convert_contextual(h1)
    h1 = jnp.tanh(jnp.dot(h1, w_cc, preferred_element_type=f32) + b_cc)

    # str{1,2}_h2 = self.knowledge_embedding(x2[{0,1}])  -- fused into ONE lookup:
    # one [2B,V] one-hot and one [2B,V]@[V,K] MXU dot (exact gather).
    idx = idx_ref[...]                                   # [2B, 1] int32
    vocab_iota = lax.broadcasted_iota(jnp.int32, (2 * B, V), 1)
    onehot = (vocab_iota == idx).astype(f32)             # [2B, V]
    emb = jnp.dot(onehot, table, preferred_element_type=f32)  # [2B, K]

    # h2 = self.converter(cat([str1_h2, str2_h2], dim=1)) -- single dot against
    # the original unsplit [2K, E] weight.
    emb_cat = jnp.concatenate([emb[0:B, :], emb[B:2 * B, :]], axis=1)  # [B, 2K]
    h2 = jnp.tanh(jnp.dot(emb_cat, w_cv, preferred_element_type=f32) + b_cv)

    # h = self.combine([h1, h2]) = tanh(cat([h1, h2, h1-h2, h1*h2]) @ W + b)
    # Fused: one [B, 4E]=[8,128] lane-concat, one K=128 contraction.
    comb_in = jnp.concatenate([h1, h2, h1 - h2, h1 * h2], axis=1)      # [8, 128]
    h = jnp.tanh(jnp.dot(comb_in, w_cb, preferred_element_type=f32) + b_cb)

    # h = self.classification_layer(h); y = self.softmax(h)  (softmax over dim=1)
    logits = jnp.dot(h, w_cls, preferred_element_type=f32) + b_cls
    m = jnp.max(logits, axis=-1, keepdims=True)
    e = jnp.exp(logits - m)
    y_ref[...] = e / jnp.sum(e, axis=-1, keepdims=True)


def pack_params(params):
    """Pack all weights/biases into one lane-padded [ROWS, 128] f32 slab."""
    (table, w_enc, b_enc, w_cc, b_cc, w_cv, b_cv, w_cb, b_cb, w_cls, b_cls) = params
    slab = jnp.zeros((ROWS, LANES), jnp.float32)
    slab = slab.at[R_TABLE:R_TABLE + V, :K].set(table)
    slab = slab.at[R_WENC:R_WENC + D_IN, :C_OUT].set(w_enc)
    slab = slab.at[R_WCC:R_WCC + C_OUT, :E].set(w_cc)
    slab = slab.at[R_WCV:R_WCV + 2 * K, :E].set(w_cv)
    slab = slab.at[R_WCB:R_WCB + 4 * E, :E].set(w_cb)
    slab = slab.at[R_WCLS:R_WCLS + E, :OUT].set(w_cls)
    slab = slab.at[R_BIAS + 0, :C_OUT].set(b_enc[0])
    slab = slab.at[R_BIAS + 1, :E].set(b_cc[0])
    slab = slab.at[R_BIAS + 2, :E].set(b_cv[0])
    slab = slab.at[R_BIAS + 3, :E].set(b_cb[0])
    slab = slab.at[R_BIAS + 4, :OUT].set(b_cls[0])
    return slab


def knowledge_model_forward(x1, idx1, idx2, param_slab):
    # Merge the two per-example knowledge-entry id vectors into one [2B,1] input.
    idx = jnp.concatenate([idx1, idx2], axis=0).astype(jnp.int32)
    vmem = pl.BlockSpec(memory_space=pltpu.MemorySpace.VMEM)
    return pl.pallas_call(
        knowledge_model_kernel,
        out_shape=jax.ShapeDtypeStruct((B, OUT), jnp.float32),
        in_specs=[vmem, vmem, vmem],
        out_specs=vmem,
    )(x1, idx, param_slab)


def reference_forward(x1, idx1, idx2, params):
    """Pure-JAX reference for correctness checking (unpacked params)."""
    (table, w_enc, b_enc, w_cc, b_cc, w_cv, b_cv, w_cb, b_cb, w_cls, b_cls) = params
    h1 = jnp.tanh(x1 @ w_enc + b_enc)
    h1 = jnp.tanh(h1 @ w_cc + b_cc)
    emb1 = table[idx1[:, 0]]
    emb2 = table[idx2[:, 0]]
    h2 = jnp.tanh(jnp.concatenate([emb1, emb2], axis=1) @ w_cv + b_cv)
    comb = jnp.concatenate([h1, h2, h1 - h2, h1 * h2], axis=1)
    h = jnp.tanh(comb @ w_cb + b_cb)
    logits = h @ w_cls + b_cls
    return jax.nn.softmax(logits, axis=-1)


def init_params(key):
    ks = jax.random.split(key, 11)
    scale = 0.1
    table = jax.random.normal(ks[0], (V, K), jnp.float32)                 # sentence_transe
    w_enc = scale * jax.random.normal(ks[1], (D_IN, C_OUT), jnp.float32)  # base_model stand-in
    b_enc = scale * jax.random.normal(ks[2], (1, C_OUT), jnp.float32)
    w_cc = scale * jax.random.normal(ks[3], (C_OUT, E), jnp.float32)      # convert_contextual
    b_cc = scale * jax.random.normal(ks[4], (1, E), jnp.float32)
    w_cv = scale * jax.random.normal(ks[5], (2 * K, E), jnp.float32)      # converter
    b_cv = scale * jax.random.normal(ks[6], (1, E), jnp.float32)
    w_cb = scale * jax.random.normal(ks[7], (4 * E, E), jnp.float32)      # combine
    b_cb = scale * jax.random.normal(ks[8], (1, E), jnp.float32)
    w_cls = scale * jax.random.normal(ks[9], (E, OUT), jnp.float32)       # classification
    b_cls = scale * jax.random.normal(ks[10], (1, OUT), jnp.float32)
    return (table, w_enc, b_enc, w_cc, b_cc, w_cv, b_cv, w_cb, b_cb, w_cls, b_cls)


if __name__ == "__main__":
    key = jax.random.PRNGKey(0)
    k_x, k_i1, k_i2, k_p = jax.random.split(key, 4)

    # x = (x1, (x2[0], x2[1])): contextual features + two knowledge-entry ids per example.
    x1 = jax.random.normal(k_x, (B, D_IN), jnp.float32)
    idx1 = jax.random.randint(k_i1, (B, 1), 0, V, jnp.int32)
    idx2 = jax.random.randint(k_i2, (B, 1), 0, V, jnp.int32)
    params = init_params(k_p)
    slab = pack_params(params)

    y = knowledge_model_forward(x1, idx1, idx2, slab)
    y = jax.block_until_ready(y)

    y_ref = jax.block_until_ready(reference_forward(x1, idx1, idx2, params))
    assert y.shape == (B, OUT)
    np.testing.assert_allclose(np.asarray(y), np.asarray(y_ref), rtol=1e-5, atol=1e-5)
    np.testing.assert_allclose(np.asarray(y).sum(axis=-1), np.ones(B), rtol=1e-5, atol=1e-5)

    print("KERNEL_OK")
</pallas_src>

<mosaic_0001>
module attributes {stable_mosaic.version = 11 : i64} {
  func.func @knowledge_model_kernel(%arg0: memref<8x64xf32, #tpu.memory_space<vmem>>, %arg1: memref<16x1xi32, #tpu.memory_space<vmem>>, %arg2: memref<376x128xf32, #tpu.memory_space<vmem>>, %arg3: memref<8x3xf32, #tpu.memory_space<vmem>>) attributes {dimension_semantics = [], scalar_prefetch = 0 : i64, scratch_operands = 0 : i64, tpu.core_type = #tpu.core_type<tc>} {
    %c0 = arith.constant 0 : index
    %c0_0 = arith.constant 0 : index
    %0 = vector.load %arg2[%c0, %c0_0] : memref<376x128xf32, #tpu.memory_space<vmem>>, vector<64x16xf32>
    %c64 = arith.constant 64 : index
    %c0_1 = arith.constant 0 : index
    %1 = vector.load %arg2[%c64, %c0_1] : memref<376x128xf32, #tpu.memory_space<vmem>>, vector<64x48xf32>
    %c128 = arith.constant 128 : index
    %c0_2 = arith.constant 0 : index
    %2 = vector.load %arg2[%c128, %c0_2] : memref<376x128xf32, #tpu.memory_space<vmem>>, vector<48x32xf32>
    %c176 = arith.constant 176 : index
    %c0_3 = arith.constant 0 : index
    %3 = vector.load %arg2[%c176, %c0_3] : memref<376x128xf32, #tpu.memory_space<vmem>>, vector<32x32xf32>
    %c208 = arith.constant 208 : index
    %c0_4 = arith.constant 0 : index
    %4 = vector.load %arg2[%c208, %c0_4] : memref<376x128xf32, #tpu.memory_space<vmem>>, vector<128x32xf32>
    %c336 = arith.constant 336 : index
    %c0_5 = arith.constant 0 : index
    %5 = vector.load %arg2[%c336, %c0_5] : memref<376x128xf32, #tpu.memory_space<vmem>>, vector<32x3xf32>
    %c368 = arith.constant 368 : index
    %c0_6 = arith.constant 0 : index
    %6 = vector.load %arg2[%c368, %c0_6] : memref<376x128xf32, #tpu.memory_space<vmem>>, vector<8x128xf32>
    %7 = vector.extract_strided_slice %6 {offsets = [0, 0], sizes = [1, 48], strides = [1, 1]} : vector<8x128xf32> to vector<1x48xf32>
    %8 = vector.extract_strided_slice %6 {offsets = [1, 0], sizes = [1, 32], strides = [1, 1]} : vector<8x128xf32> to vector<1x32xf32>
    %9 = vector.extract_strided_slice %6 {offsets = [2, 0], sizes = [1, 32], strides = [1, 1]} : vector<8x128xf32> to vector<1x32xf32>
    %10 = vector.extract_strided_slice %6 {offsets = [3, 0], sizes = [1, 32], strides = [1, 1]} : vector<8x128xf32> to vector<1x32xf32>
    %11 = vector.extract_strided_slice %6 {offsets = [4, 0], sizes = [1, 3], strides = [1, 1]} : vector<8x128xf32> to vector<1x3xf32>
    %c0_7 = arith.constant 0 : index
    %c0_8 = arith.constant 0 : index
    %12 = vector.load %arg0[%c0_7, %c0_8] : memref<8x64xf32, #tpu.memory_space<vmem>>, vector<8x64xf32>
    %cst = arith.constant dense<0.000000e+00> : vector<8x48xf32>
    %13 = tpu.matmul %12, %1, %cst {dimension_numbers = #tpu.dot_dimension_numbers<[1], [0], [0], [1], [0, 0, 1, 1], [], []>} : vector<8x64xf32>, vector<64x48xf32>, vector<8x48xf32> -> vector<8x48xf32>
    %14 = vector.broadcast %7 : vector<1x48xf32> to vector<8x48xf32>
    %15 = arith.addf %13, %14 : vector<8x48xf32>
    %16 = math.tanh %15 : vector<8x48xf32>
    %cst_9 = arith.constant dense<0.000000e+00> : vector<8x32xf32>
    %17 = tpu.matmul %16, %2, %cst_9 {dimension_numbers = #tpu.dot_dimension_numbers<[1], [0], [0], [1], [0, 0, 1, 1], [], []>} : vector<8x48xf32>, vector<48x32xf32>, vector<8x32xf32> -> vector<8x32xf32>
    %18 = vector.broadcast %8 : vector<1x32xf32> to vector<8x32xf32>
    %19 = arith.addf %17, %18 : vector<8x32xf32>
    %20 = math.tanh %19 : vector<8x32xf32>
    %c0_10 = arith.constant 0 : index
    %c0_11 = arith.constant 0 : index
    %21 = vector.load %arg1[%c0_10, %c0_11] : memref<16x1xi32, #tpu.memory_space<vmem>>, vector<16x1xi32>
    %22 = tpu.iota {dimensions = array<i32: 1>} : vector<16x64xi32>
    %23 = vector.broadcast %21 : vector<16x1xi32> to vector<16x64xi32>
    %24 = arith.cmpi eq, %22, %23 : vector<16x64xi32>
    %25 = arith.extui %24 : vector<16x64xi1> to vector<16x64xi32>
    %26 = arith.sitofp %25 : vector<16x64xi32> to vector<16x64xf32>
    %cst_12 = arith.constant dense<0.000000e+00> : vector<16x16xf32>
    %27 = tpu.matmul %26, %0, %cst_12 {dimension_numbers = #tpu.dot_dimension_numbers<[1], [0], [0], [1], [0, 0, 1, 1], [], []>} : vector<16x64xf32>, vector<64x16xf32>, vector<16x16xf32> -> vector<16x16xf32>
    %28 = vector.extract_strided_slice %27 {offsets = [0, 0], sizes = [8, 16], strides = [1, 1]} : vector<16x16xf32> to vector<8x16xf32>
    %29 = vector.extract_strided_slice %27 {offsets = [8, 0], sizes = [8, 16], strides = [1, 1]} : vector<16x16xf32> to vector<8x16xf32>
    %30 = tpu.concatenate %28, %29 in 1 : vector<8x16xf32>, vector<8x16xf32> -> vector<8x32xf32>
    %cst_13 = arith.constant dense<0.000000e+00> : vector<8x32xf32>
    %31 = tpu.matmul %30, %3, %cst_13 {dimension_numbers = #tpu.dot_dimension_numbers<[1], [0], [0], [1], [0, 0, 1, 1], [], []>} : vector<8x32xf32>, vector<32x32xf32>, vector<8x32xf32> -> vector<8x32xf32>
    %32 = vector.broadcast %9 : vector<1x32xf32> to vector<8x32xf32>
    %33 = arith.addf %31, %32 : vector<8x32xf32>
    %34 = math.tanh %33 : vector<8x32xf32>
    %35 = arith.subf %20, %34 : vector<8x32xf32>
    %36 = arith.mulf %20, %34 : vector<8x32xf32>
    %37 = tpu.concatenate %20, %34, %35, %36 in 1 : vector<8x32xf32>, vector<8x32xf32>, vector<8x32xf32>, vector<8x32xf32> -> vector<8x128xf32>
    %cst_14 = arith.constant dense<0.000000e+00> : vector<8x32xf32>
    %38 = tpu.matmul %37, %4, %cst_14 {dimension_numbers = #tpu.dot_dimension_numbers<[1], [0], [0], [1], [0, 0, 1, 1], [], []>} : vector<8x128xf32>, vector<128x32xf32>, vector<8x32xf32> -> vector<8x32xf32>
    %39 = vector.broadcast %10 : vector<1x32xf32> to vector<8x32xf32>
    %40 = arith.addf %38, %39 : vector<8x32xf32>
    %41 = math.tanh %40 : vector<8x32xf32>
    %cst_15 = arith.constant dense<0.000000e+00> : vector<8x3xf32>
    %42 = tpu.matmul %41, %5, %cst_15 {dimension_numbers = #tpu.dot_dimension_numbers<[1], [0], [0], [1], [0, 0, 1, 1], [], []>} : vector<8x32xf32>, vector<32x3xf32>, vector<8x3xf32> -> vector<8x3xf32>
    %43 = vector.broadcast %11 : vector<1x3xf32> to vector<8x3xf32>
    %44 = arith.addf %42, %43 : vector<8x3xf32>
    %cst_16 = arith.constant dense<0xFF800000> : vector<8xf32>
    %45 = vector.multi_reduction <maximumf>, %44, %cst_16 [1] : vector<8x3xf32> to vector<8xf32>
    %46 = vector.shape_cast %45 : vector<8xf32> to vector<8x1xf32>
    %47 = vector.broadcast %46 : vector<8x1xf32> to vector<8x3xf32>
    %48 = arith.subf %44, %47 : vector<8x3xf32>
    %49 = math.exp %48 : vector<8x3xf32>
    %cst_17 = arith.constant dense<0.000000e+00> : vector<8xf32>
    %50 = vector.multi_reduction <add>, %49, %cst_17 [1] : vector<8x3xf32> to vector<8xf32>
    %51 = vector.shape_cast %50 : vector<8xf32> to vector<8x1xf32>
    %52 = vector.broadcast %51 : vector<8x1xf32> to vector<8x3xf32>
    %53 = arith.divf %49, %52 : vector<8x3xf32>
    %c0_18 = arith.constant 0 : index
    %c0_19 = arith.constant 0 : index
    %54 = vector.load %arg3[%c0_18, %c0_19] : memref<8x3xf32, #tpu.memory_space<vmem>>, vector<8x3xf32>
    tpu.vector_store %arg3[%c0_18, %c0_19], %53 {strides = array<i32>} : memref<8x3xf32, #tpu.memory_space<vmem>>, vector<8x3xf32>,
    return
  }
}

</mosaic_0001>

<llo_original>
// kernel: tpu_custom_call.1
$region0: #{tpu_custom_call.1}
  #allocation0 [shape = 'u32[]', space=smem, size = 0x4, offset = 0x4, fixed_abs, tag = 'smem constant byte address 0x4 - core index']
  #allocation1 [shape = 'u32[144,128]{1,0:T(1,128)}', space=vmem, size = 0x12000, scoped, tag = 'internal scratch']
  %s0 = inlined_call_operand.vmem [shape: f32[8,64], index: 0, kind: input, shape index: {}]
  %s1 = inlined_call_operand.vmem [shape: s32[16,1], index: 1, kind: input, shape index: {}]
  %s2 = inlined_call_operand.hbm [shape: f32[376,128], index: 2, kind: input, shape index: {}]
  %s3 = inlined_call_operand.vmem [shape: f32[8,3], index: 3, kind: output, shape index: {}]
  %s4 = sld [smem:[#allocation0]]
  $region26: #{tpu_custom_call.1} parent=0
    _
  %s6 = ssub.s32 1, %s4
  %s7 = scalar_select 0, %s6, %s4
  $region1: #{tpu_custom_call.1} parent=0
    #allocation2 [shape = 'u8[192512]{0}', space=vmem, size = 0x2f000, scoped, tag = 'input window, operand 2, single buffered']
    #allocation3 [shape = 's32[1]{0}', space=sflag, size = 0x4, scoped, tag = 'scoped memory for tpu_custom_call.1']
    %8 = vsyncpa [#allocation3], 0
    // Predicated region
    $region2: #{tpu_custom_call.1} parent=1 // pred_check
      _
    $region3: #{tpu_custom_call.1} parent=1 // pred_check_branch
      %10 = sbr.rel (0) target = $region5
    $region4: #{tpu_custom_call.1} parent=1 // pred_region
      _
    $region5: #{tpu_custom_call.1} parent=1 // pred_fallthru
      _
    // Predicated region
    $region6: #{tpu_custom_call.1} parent=1 // pred_check
      _
    $region7: #{tpu_custom_call.1} parent=1 // pred_check_branch
      %12 = sbr.rel (0) target = $region9
    $region8: #{tpu_custom_call.1} parent=1 // pred_region
      _
    $region9: #{tpu_custom_call.1} parent=1 // pred_fallthru
      _
    // Predicated region
    $region10: #{tpu_custom_call.1} parent=1 // pred_check
      _
    $region11: #{tpu_custom_call.1} parent=1 // pred_check_branch
      %14 = sbr.rel (0) target = $region13
    $region12: #{tpu_custom_call.1} parent=1 // pred_region
      %s16 = ssub.s32 6016, 6016
      %17 = vsyncadd [#allocation3], %s16
      %s18 = sshll.u32 [#allocation2], 4
      %s19 = int_to_ptr.vmem [resolvable:$true] %s18
      %24 = dma.hbm_to_vmem [thread:$0]  %s2, 6016, %s19, [#allocation3], 128, 128, 8
    $region13: #{tpu_custom_call.1} parent=1 // pred_fallthru
      _
    // Predicated region
    $region14: #{tpu_custom_call.1} parent=1 // pred_check
      _
    $region15: #{tpu_custom_call.1} parent=1 // pred_check_branch
      %26 = sbr.rel (0) target = $region17
    $region16: #{tpu_custom_call.1} parent=1 // pred_region
      %27 = dma.done [#allocation3], 6016
    $region17: #{tpu_custom_call.1} parent=1 // pred_fallthru
      _
    %v28 = vld [vmem:[#allocation2] sm:$0xff]
    %v29 = vld [vmem:[#allocation2 + $0x8] sm:$0xff]
    %v30 = vld [vmem:[#allocation2 + $0x10] sm:$0xff]
    %v31 = vld [vmem:[#allocation2 + $0x18] sm:$0xff]
    %v32 = vld [vmem:[#allocation2 + $0x20] sm:$0xff]
    %v33 = vld [vmem:[#allocation2 + $0x28] sm:$0xff]
    %v34 = vld [vmem:[#allocation2 + $0x30] sm:$0xff]
    %v35 = vld [vmem:[#allocation2 + $0x38] sm:$0xff]
    %v36 = vld [vmem:[#allocation2 + $0x40] sm:$0xff]
    %v37 = vld [vmem:[#allocation2 + $0x48] sm:$0xff]
    %v38 = vld [vmem:[#allocation2 + $0x50] sm:$0xff]
    %v39 = vld [vmem:[#allocation2 + $0x58] sm:$0xff]
    %v40 = vld [vmem:[#allocation2 + $0x60] sm:$0xff]
    %v41 = vld [vmem:[#allocation2 + $0x68] sm:$0xff]
    %v42 = vld [vmem:[#allocation2 + $0x70] sm:$0xff]
    %v43 = vld [vmem:[#allocation2 + $0x78] sm:$0xff]
    %v44 = vld [vmem:[#allocation2 + $0x80] sm:$0xff]
    %v45 = vld [vmem:[#allocation2 + $0x88] sm:$0xff]
    %v46 = vld [vmem:[#allocation2 + $0x90] sm:$0xff]
    %v47 = vld [vmem:[#allocation2 + $0x98] sm:$0xff]
    %v48 = vld [vmem:[#allocation2 + $0xa0] sm:$0xff]
    %v49 = vld [vmem:[#allocation2 + $0xa8] sm:$0xff]
    %v50 = vld [vmem:[#allocation2 + $0xb0] sm:$0xff]
    %v51 = vld [vmem:[#allocation2 + $0xb8] sm:$0xff]
    %v52 = vld [vmem:[#allocation2 + $0xc0] sm:$0xff]
    %v53 = vld [vmem:[#allocation2 + $0xc8] sm:$0xff]
    %v54 = vld [vmem:[#allocation2 + $0xd0] sm:$0xff]
    %v55 = vld [vmem:[#allocation2 + $0xd8] sm:$0xff]
    %v56 = vld [vmem:[#allocation2 + $0xe0] sm:$0xff]
    %v57 = vld [vmem:[#allocation2 + $0xe8] sm:$0xff]
    %v58 = vld [vmem:[#allocation2 + $0xf0] sm:$0xff]
    %v59 = vld [vmem:[#allocation2 + $0xf8] sm:$0xff]
    %v60 = vld [vmem:[#allocation2 + $0x100] sm:$0xff]
    %v61 = vld [vmem:[#allocation2 + $0x108] sm:$0xff]
    %v62 = vld [vmem:[#allocation2 + $0x110] sm:$0xff]
    %v63 = vld [vmem:[#allocation2 + $0x118] sm:$0xff]
    %v64 = vld [vmem:[#allocation2 + $0x120] sm:$0xff]
    %v65 = vld [vmem:[#allocation2 + $0x128] sm:$0xff]
    %v66 = vld [vmem:[#allocation2 + $0x130] sm:$0xff]
    %v67 = vld [vmem:[#allocation2 + $0x138] sm:$0xff]
    %v68 = vld [vmem:[#allocation2 + $0x140] sm:$0xff]
    %v69 = vld [vmem:[#allocation2 + $0x148] sm:$0xff]
    %v70 = vld [vmem:[#allocation2 + $0x150] sm:$0xff]
    %v71 = vld [vmem:[#allocation2 + $0x158] sm:$0xff]
    %v72 = vld [vmem:[#allocation2 + $0x160] sm:$0xff]
    %v73 = vld [vmem:[#allocation2 + $0x168] sm:$0xff]
    %v74 = vld [vmem:[#allocation2 + $0x170] sm:$0xff]
    %v75 = vld [vmem:[%s0] sm:$0xff]
    %v76 = vlaneseq
    %v77 = vshrl.u32 %v76, 7
    %v78 = vsub.s32 0, %v77
    %v79 = vrot.slane %v74, %v78
    %vm80 = vcmask 523264
    %v82 = vsel %vm80, %v75, 0
    %84 = vmatprep.subr.mxu0 0.0
    %85 = vmatpush1.msra.mxu0 0.0
    %86 = vmatprep.subr.mxu0 0.0
    %87 = vmatpush1.msra.mxu0 0.0
    %88 = vmatprep.subr.mxu0 0.0
    %89 = vmatpush1.msra.mxu0 0.0
    %90 = vmatprep.subr.mxu0 0.0
    %91 = vmatpush1.msra.mxu0 0.0
    %92 = vmatprep.subr.mxu0 0.0
    %93 = vmatpush1.msra.mxu0 0.0
    %94 = vmatprep.subr.mxu0 0.0
    %95 = vmatpush1.msra.mxu0 0.0
    %96 = vmatprep.subr.mxu0 0.0
    %97 = vmatpush1.msra.mxu0 0.0
    %98 = vmatprep.subr.mxu0 0.0
    %99 = vmatpush1.msra.mxu0 0.0
    %100 = vmatprep.subr.mxu0 0.0
    %101 = vmatpush1.msra.mxu0 %v43
    %102 = vmatprep.subr.mxu0 0.0
    %103 = vmatpush1.msra.mxu0 %v42
    %104 = vmatprep.subr.mxu0 0.0
    %105 = vmatpush1.msra.mxu0 %v41
    %106 = vmatprep.subr.mxu0 0.0
    %107 = vmatpush1.msra.mxu0 %v40
    %108 = vmatprep.subr.mxu0 0.0
    %109 = vmatpush1.msra.mxu0 %v39
    %110 = vmatprep.subr.mxu0 0.0
    %111 = vmatpush1.msra.mxu0 %v38
    %112 = vmatprep.subr.mxu0 0.0
    %113 = vmatpush1.msra.mxu0 %v37
    %114 = vmatprep.subr.mxu0 0.0
    %115 = vmatpush1.msra.mxu0 %v36
    %116 = vmatprep.subr.mxu0 0.0
    %117 = vmatpush2.msra.mxu0 0.0
    %118 = vmatprep.subr.mxu0 0.0
    %119 = vmatpush2.msra.mxu0 0.0
    %120 = vmatprep.subr.mxu0 0.0
    %121 = vmatpush2.msra.mxu0 0.0
    %122 = vmatprep.subr.mxu0 0.0
    %123 = vmatpush2.msra.mxu0 0.0
    %124 = vmatprep.subr.mxu0 0.0
    %125 = vmatpush2.msra.mxu0 0.0
    %126 = vmatprep.subr.mxu0 0.0
    %127 = vmatpush2.msra.mxu0 0.0
    %128 = vmatprep.subr.mxu0 0.0
    %129 = vmatpush2.msra.mxu0 0.0
    %130 = vmatprep.subr.mxu0 0.0
    %131 = vmatpush2.msra.mxu0 0.0
    %132 = vmatprep.subr.mxu0 0.0
    %133 = vmatpush2.msra.mxu0 0.0
    %134 = vmatprep.subr.mxu0 0.0
    %135 = vmatpush2.msra.mxu0 0.0
    %136 = vmatprep.subr.mxu0 0.0
    %137 = vmatpush2.msra.mxu0 0.0
    %138 = vmatprep.subr.mxu0 0.0
    %139 = vmatpush2.msra.mxu0 0.0
    %140 = vmatprep.subr.mxu0 0.0
    %141 = vmatpush2.msra.mxu0 0.0
    %142 = vmatprep.subr.mxu0 0.0
    %143 = vmatpush2.msra.mxu0 0.0
    %144 = vmatprep.subr.mxu0 0.0
    %145 = vmatpush2.msra.mxu0 0.0
    %146 = vmatprep.subr.mxu0 0.0
    %147 = vmatpush2.msra.mxu0 0.0
    %148 = vmatprep.mubr.f32.mxu0 0.0
    %149 = vmatmul.mubr.f32.gmra.mxu0 %v82
    %v150 = vpop.f32.mrf.mxu0
    %v151 = vadd.f32 %v79, %v150
    %v152 = vpop.f32.mrf.mxu0
    %153 = vdwg.mxu0
    %v154 = vtanh.pop %v151
    %v155 = vlaneseq
    %v156 = vshrl.u32 %v155, 7
    %v157 = vsub.s32 1, %v156
    %v158 = vrot.slane %v74, %v157
    %vm159 = vcmask 392192
    %v161 = vsel %vm159, %v154, 0
    %163 = vmatprep.subr.mxu0 0.0
    %164 = vmatpush1.msra.mxu0 0.0
    %165 = vmatprep.subr.mxu0 0.0
    %166 = vmatpush1.msra.mxu0 0.0
    %167 = vmatprep.subr.mxu0 0.0
    %168 = vmatpush1.msra.mxu0 0.0
    %169 = vmatprep.subr.mxu0 0.0
    %170 = vmatpush1.msra.mxu0 0.0
    %171 = vmatprep.subr.mxu0 0.0
    %172 = vmatpush1.msra.mxu0 0.0
    %173 = vmatprep.subr.mxu0 0.0
    %174 = vmatpush1.msra.mxu0 0.0
    %175 = vmatprep.subr.mxu0 0.0
    %176 = vmatpush1.msra.mxu0 0.0
    %177 = vmatprep.subr.mxu0 0.0
    %178 = vmatpush1.msra.mxu0 0.0
    %179 = vmatprep.subr.mxu0 0.0
    %180 = vmatpush1.msra.mxu0 0.0
    %181 = vmatprep.subr.mxu0 0.0
    %182 = vmatpush1.msra.mxu0 0.0
    %183 = vmatprep.subr.mxu0 0.0
    %184 = vmatpush1.msra.mxu0 %v49
    %185 = vmatprep.subr.mxu0 0.0
    %186 = vmatpush1.msra.mxu0 %v48
    %187 = vmatprep.subr.mxu0 0.0
    %188 = vmatpush1.msra.mxu0 %v47
    %189 = vmatprep.subr.mxu0 0.0
    %190 = vmatpush1.msra.mxu0 %v46
    %191 = vmatprep.subr.mxu0 0.0
    %192 = vmatpush1.msra.mxu0 %v45
    %193 = vmatprep.subr.mxu0 0.0
    %194 = vmatpush1.msra.mxu0 %v44
    %195 = vmatprep.subr.mxu0 0.0
    %196 = vmatpush2.msra.mxu0 0.0
    %197 = vmatprep.subr.mxu0 0.0
    %198 = vmatpush2.msra.mxu0 0.0
    %199 = vmatprep.subr.mxu0 0.0
    %200 = vmatpush2.msra.mxu0 0.0
    %201 = vmatprep.subr.mxu0 0.0
    %202 = vmatpush2.msra.mxu0 0.0
    %203 = vmatprep.subr.mxu0 0.0
    %204 = vmatpush2.msra.mxu0 0.0
    %205 = vmatprep.subr.mxu0 0.0
    %206 = vmatpush2.msra.mxu0 0.0
    %207 = vmatprep.subr.mxu0 0.0
    %208 = vmatpush2.msra.mxu0 0.0
    %209 = vmatprep.subr.mxu0 0.0
    %210 = vmatpush2.msra.mxu0 0.0
    %211 = vmatprep.subr.mxu0 0.0
    %212 = vmatpush2.msra.mxu0 0.0
    %213 = vmatprep.subr.mxu0 0.0
    %214 = vmatpush2.msra.mxu0 0.0
    %215 = vmatprep.subr.mxu0 0.0
    %216 = vmatpush2.msra.mxu0 0.0
    %217 = vmatprep.subr.mxu0 0.0
    %218 = vmatpush2.msra.mxu0 0.0
    %219 = vmatprep.subr.mxu0 0.0
    %220 = vmatpush2.msra.mxu0 0.0
    %221 = vmatprep.subr.mxu0 0.0
    %222 = vmatpush2.msra.mxu0 0.0
    %223 = vmatprep.subr.mxu0 0.0
    %224 = vmatpush2.msra.mxu0 0.0
    %225 = vmatprep.subr.mxu0 0.0
    %226 = vmatpush2.msra.mxu0 0.0
    %227 = vmatprep.mubr.f32.mxu0 0.0
    %228 = vmatmul.mubr.f32.gmra.mxu0 %v161
    %v229 = vpop.f32.mrf.mxu0
    %v230 = vadd.f32 %v158, %v229
    %v231 = vpop.f32.mrf.mxu0
    %232 = vdwg.mxu0
    %v233 = vtanh.pop %v230
    %v234 = vld [vmem:[%s1] sm:$0xff]
    %v235 = vld [vmem:[%s1 + $0x8] sm:$0xff]
    %v236 = vlaneseq
    %v237 = vand.u32 %v236, 127
    %238 = vset.pattern.permute.xlu0 0
    %239 = vperm.xlu0 %238, %v234
    %v240 = vpop.permute.xlu0 %239
    %241 = vset.pattern.permute.xlu0 0
    %242 = vperm.xlu0 %241, %v235
    %v243 = vpop.permute.xlu0 %242
    %vm244 = vcmp.eq.s32.totalorder %v237, %v240
    %vm245 = vcmp.eq.s32.totalorder %v237, %v243
    %v246 = vsel %vm244, 1, 0
    %v247 = vsel %vm245, 1, 0
    %v248 = vcvt.s32.f32 %v246
    %v249 = vcvt.s32.f32 %v247
    %v251 = vsel %vm80, %v248, 0
    %v254 = vsel %vm80, %v249, 0
    %256 = vmatprep.subr.mxu0 0.0
    %257 = vmatpush1.msra.mxu0 0.0
    %258 = vmatprep.subr.mxu0 0.0
    %259 = vmatpush1.msra.mxu0 0.0
    %260 = vmatprep.subr.mxu0 0.0
    %261 = vmatpush1.msra.mxu0 0.0
    %262 = vmatprep.subr.mxu0 0.0
    %263 = vmatpush1.msra.mxu0 0.0
    %264 = vmatprep.subr.mxu0 0.0
    %265 = vmatpush1.msra.mxu0 0.0
    %266 = vmatprep.subr.mxu0 0.0
    %267 = vmatpush1.msra.mxu0 0.0
    %268 = vmatprep.subr.mxu0 0.0
    %269 = vmatpush1.msra.mxu0 0.0
    %270 = vmatprep.subr.mxu0 0.0
    %271 = vmatpush1.msra.mxu0 0.0
    %272 = vmatprep.subr.mxu0 0.0
    %273 = vmatpush1.msra.mxu0 %v35
    %274 = vmatprep.subr.mxu0 0.0
    %275 = vmatpush1.msra.mxu0 %v34
    %276 = vmatprep.subr.mxu0 0.0
    %277 = vmatpush1.msra.mxu0 %v33
    %278 = vmatprep.subr.mxu0 0.0
    %279 = vmatpush1.msra.mxu0 %v32
    %280 = vmatprep.subr.mxu0 0.0
    %281 = vmatpush1.msra.mxu0 %v31
    %282 = vmatprep.subr.mxu0 0.0
    %283 = vmatpush1.msra.mxu0 %v30
    %284 = vmatprep.subr.mxu0 0.0
    %285 = vmatpush1.msra.mxu0 %v29
    %286 = vmatprep.subr.mxu0 0.0
    %287 = vmatpush1.msra.mxu0 %v28
    %288 = vmatprep.subr.mxu0 0.0
    %289 = vmatpush2.msra.mxu0 0.0
    %290 = vmatprep.subr.mxu0 0.0
    %291 = vmatpush2.msra.mxu0 0.0
    %292 = vmatprep.subr.mxu0 0.0
    %293 = vmatpush2.msra.mxu0 0.0
    %294 = vmatprep.subr.mxu0 0.0
    %295 = vmatpush2.msra.mxu0 0.0
    %296 = vmatprep.subr.mxu0 0.0
    %297 = vmatpush2.msra.mxu0 0.0
    %298 = vmatprep.subr.mxu0 0.0
    %299 = vmatpush2.msra.mxu0 0.0
    %300 = vmatprep.subr.mxu0 0.0
    %301 = vmatpush2.msra.mxu0 0.0
    %302 = vmatprep.subr.mxu0 0.0
    %303 = vmatpush2.msra.mxu0 0.0
    %304 = vmatprep.subr.mxu0 0.0
    %305 = vmatpush2.msra.mxu0 0.0
    %306 = vmatprep.subr.mxu0 0.0
    %307 = vmatpush2.msra.mxu0 0.0
    %308 = vmatprep.subr.mxu0 0.0
    %309 = vmatpush2.msra.mxu0 0.0
    %310 = vmatprep.subr.mxu0 0.0
    %311 = vmatpush2.msra.mxu0 0.0
    %312 = vmatprep.subr.mxu0 0.0
    %313 = vmatpush2.msra.mxu0 0.0
    %314 = vmatprep.subr.mxu0 0.0
    %315 = vmatpush2.msra.mxu0 0.0
    %316 = vmatprep.subr.mxu0 0.0
    %317 = vmatpush2.msra.mxu0 0.0
    %318 = vmatprep.subr.mxu0 0.0
    %319 = vmatpush2.msra.mxu0 0.0
    %320 = vmatprep.mubr.f32.mxu0 0.0
    %321 = vmatmul.mubr.f32.gmra.mxu0 %v251
    %v322 = vpop.f32.mrf.mxu0
    %v323 = vadd.f32 0.0, %v322
    %v324 = vpop.f32.mrf.mxu0
    %325 = vmatprep.mubr.f32.mxu0 0.0
    %326 = vmatmul.mubr.f32.gmra.mxu0 %v254
    %v327 = vpop.f32.mrf.mxu0
    %v328 = vadd.f32 0.0, %v327
    %v329 = vpop.f32.mrf.mxu0
    %330 = vdwg.mxu0
    %332 = vrot.lane.b32.xlu0 %v328, 16
    %v333 = vpop.permute.xlu0 %332
    %vm335 = vcmask 130048
    %v336 = vsel %vm335, %v323, %v333
    %v337 = vlaneseq
    %v338 = vshrl.u32 %v337, 7
    %v339 = vsub.s32 2, %v338
    %v340 = vrot.slane %v74, %v339
    %vm341 = vcmask 261120
    %v343 = vsel %vm341, %v336, 0
    %345 = vmatprep.subr.mxu0 0.0
    %346 = vmatpush1.msra.mxu0 0.0
    %347 = vmatprep.subr.mxu0 0.0
    %348 = vmatpush1.msra.mxu0 0.0
    %349 = vmatprep.subr.mxu0 0.0
    %350 = vmatpush1.msra.mxu0 0.0
    %351 = vmatprep.subr.mxu0 0.0
    %352 = vmatpush1.msra.mxu0 0.0
    %353 = vmatprep.subr.mxu0 0.0
    %354 = vmatpush1.msra.mxu0 0.0
    %355 = vmatprep.subr.mxu0 0.0
    %356 = vmatpush1.msra.mxu0 0.0
    %357 = vmatprep.subr.mxu0 0.0
    %358 = vmatpush1.msra.mxu0 0.0
    %359 = vmatprep.subr.mxu0 0.0
    %360 = vmatpush1.msra.mxu0 0.0
    %361 = vmatprep.subr.mxu0 0.0
    %362 = vmatpush1.msra.mxu0 0.0
    %363 = vmatprep.subr.mxu0 0.0
    %364 = vmatpush1.msra.mxu0 0.0
    %365 = vmatprep.subr.mxu0 0.0
    %366 = vmatpush1.msra.mxu0 0.0
    %367 = vmatprep.subr.mxu0 0.0
    %368 = vmatpush1.msra.mxu0 0.0
    %369 = vmatprep.subr.mxu0 0.0
    %370 = vmatpush1.msra.mxu0 %v53
    %371 = vmatprep.subr.mxu0 0.0
    %372 = vmatpush1.msra.mxu0 %v52
    %373 = vmatprep.subr.mxu0 0.0
    %374 = vmatpush1.msra.mxu0 %v51
    %375 = vmatprep.subr.mxu0 0.0
    %376 = vmatpush1.msra.mxu0 %v50
    %377 = vmatprep.subr.mxu0 0.0
    %378 = vmatpush2.msra.mxu0 0.0
    %379 = vmatprep.subr.mxu0 0.0
    %380 = vmatpush2.msra.mxu0 0.0
    %381 = vmatprep.subr.mxu0 0.0
    %382 = vmatpush2.msra.mxu0 0.0
    %383 = vmatprep.subr.mxu0 0.0
    %384 = vmatpush2.msra.mxu0 0.0
    %385 = vmatprep.subr.mxu0 0.0
    %386 = vmatpush2.msra.mxu0 0.0
    %387 = vmatprep.subr.mxu0 0.0
    %388 = vmatpush2.msra.mxu0 0.0
    %389 = vmatprep.subr.mxu0 0.0
    %390 = vmatpush2.msra.mxu0 0.0
    %391 = vmatprep.subr.mxu0 0.0
    %392 = vmatpush2.msra.mxu0 0.0
    %393 = vmatprep.subr.mxu0 0.0
    %394 = vmatpush2.msra.mxu0 0.0
    %395 = vmatprep.subr.mxu0 0.0
    %396 = vmatpush2.msra.mxu0 0.0
    %397 = vmatprep.subr.mxu0 0.0
    %398 = vmatpush2.msra.mxu0 0.0
    %399 = vmatprep.subr.mxu0 0.0
    %400 = vmatpush2.msra.mxu0 0.0
    %401 = vmatprep.subr.mxu0 0.0
    %402 = vmatpush2.msra.mxu0 0.0
    %403 = vmatprep.subr.mxu0 0.0
    %404 = vmatpush2.msra.mxu0 0.0
    %405 = vmatprep.subr.mxu0 0.0
    %406 = vmatpush2.msra.mxu0 0.0
    %407 = vmatprep.subr.mxu0 0.0
    %408 = vmatpush2.msra.mxu0 0.0
    %409 = vmatprep.mubr.f32.mxu0 0.0
    %410 = vmatmul.mubr.f32.gmra.mxu0 %v343
    %v411 = vpop.f32.mrf.mxu0
    %v412 = vadd.f32 %v340, %v411
    %v413 = vpop.f32.mrf.mxu0
    %414 = vdwg.mxu0
    %v415 = vtanh.pop %v412
    %v416 = vsub.f32 %v233, %v415
    %v417 = vmul.f32 %v233, %v415
    %419 = vrot.lane.b32.xlu0 %v415, 32
    %v420 = vpop.permute.xlu0 %419
    %423 = vrot.lane.b32.xlu0 %v416, 64
    %v424 = vpop.permute.xlu0 %423
    %427 = vrot.lane.b32.xlu0 %v417, 96
    %v428 = vpop.permute.xlu0 %427
    %v430 = vsel %vm341, %v233, %v420
    %v431 = vsel %vm80, %v430, %v424
    %vm432 = vcmask 785408
    %v433 = vsel %vm432, %v431, %v428
    %v434 = vlaneseq
    %v435 = vshrl.u32 %v434, 7
    %v436 = vsub.s32 3, %v435
    %v437 = vrot.slane %v74, %v436
    %438 = vmatprep.subr.mxu0 0.0
    %439 = vmatpush1.msra.mxu0 %v69
    %440 = vmatprep.subr.mxu0 0.0
    %441 = vmatpush1.msra.mxu0 %v68
    %442 = vmatprep.subr.mxu0 0.0
    %443 = vmatpush1.msra.mxu0 %v67
    %444 = vmatprep.subr.mxu0 0.0
    %445 = vmatpush1.msra.mxu0 %v66
    %446 = vmatprep.subr.mxu0 0.0
    %447 = vmatpush1.msra.mxu0 %v65
    %448 = vmatprep.subr.mxu0 0.0
    %449 = vmatpush1.msra.mxu0 %v64
    %450 = vmatprep.subr.mxu0 0.0
    %451 = vmatpush1.msra.mxu0 %v63
    %452 = vmatprep.subr.mxu0 0.0
    %453 = vmatpush1.msra.mxu0 %v62
    %454 = vmatprep.subr.mxu0 0.0
    %455 = vmatpush1.msra.mxu0 %v61
    %456 = vmatprep.subr.mxu0 0.0
    %457 = vmatpush1.msra.mxu0 %v60
    %458 = vmatprep.subr.mxu0 0.0
    %459 = vmatpush1.msra.mxu0 %v59
    %460 = vmatprep.subr.mxu0 0.0
    %461 = vmatpush1.msra.mxu0 %v58
    %462 = vmatprep.subr.mxu0 0.0
    %463 = vmatpush1.msra.mxu0 %v57
    %464 = vmatprep.subr.mxu0 0.0
    %465 = vmatpush1.msra.mxu0 %v56
    %466 = vmatprep.subr.mxu0 0.0
    %467 = vmatpush1.msra.mxu0 %v55
    %468 = vmatprep.subr.mxu0 0.0
    %469 = vmatpush1.msra.mxu0 %v54
    %470 = vmatprep.subr.mxu0 0.0
    %471 = vmatpush2.msra.mxu0 0.0
    %472 = vmatprep.subr.mxu0 0.0
    %473 = vmatpush2.msra.mxu0 0.0
    %474 = vmatprep.subr.mxu0 0.0
    %475 = vmatpush2.msra.mxu0 0.0
    %476 = vmatprep.subr.mxu0 0.0
    %477 = vmatpush2.msra.mxu0 0.0
    %478 = vmatprep.subr.mxu0 0.0
    %479 = vmatpush2.msra.mxu0 0.0
    %480 = vmatprep.subr.mxu0 0.0
    %481 = vmatpush2.msra.mxu0 0.0
    %482 = vmatprep.subr.mxu0 0.0
    %483 = vmatpush2.msra.mxu0 0.0
    %484 = vmatprep.subr.mxu0 0.0
    %485 = vmatpush2.msra.mxu0 0.0
    %486 = vmatprep.subr.mxu0 0.0
    %487 = vmatpush2.msra.mxu0 0.0
    %488 = vmatprep.subr.mxu0 0.0
    %489 = vmatpush2.msra.mxu0 0.0
    %490 = vmatprep.subr.mxu0 0.0
    %491 = vmatpush2.msra.mxu0 0.0
    %492 = vmatprep.subr.mxu0 0.0
    %493 = vmatpush2.msra.mxu0 0.0
    %494 = vmatprep.subr.mxu0 0.0
    %495 = vmatpush2.msra.mxu0 0.0
    %496 = vmatprep.subr.mxu0 0.0
    %497 = vmatpush2.msra.mxu0 0.0
    %498 = vmatprep.subr.mxu0 0.0
    %499 = vmatpush2.msra.mxu0 0.0
    %500 = vmatprep.subr.mxu0 0.0
    %501 = vmatpush2.msra.mxu0 0.0
    %502 = vmatprep.mubr.f32.mxu0 0.0
    %503 = vmatmul.mubr.f32.gmra.mxu0 %v433
    %v504 = vpop.f32.mrf.mxu0
    %v505 = vadd.f32 %v437, %v504
    %v506 = vpop.f32.mrf.mxu0
    %507 = vdwg.mxu0
    %v508 = vtanh.pop %v505
    %v509 = vlaneseq
    %v510 = vshrl.u32 %v509, 7
    %v511 = vsub.s32 4, %v510
    %v512 = vrot.slane %v74, %v511
    %v514 = vsel %vm341, %v508, 0
    %516 = vmatprep.subr.mxu0 0.0
    %517 = vmatpush1.msra.mxu0 0.0
    %518 = vmatprep.subr.mxu0 0.0
    %519 = vmatpush1.msra.mxu0 0.0
    %520 = vmatprep.subr.mxu0 0.0
    %521 = vmatpush1.msra.mxu0 0.0
    %522 = vmatprep.subr.mxu0 0.0
    %523 = vmatpush1.msra.mxu0 0.0
    %524 = vmatprep.subr.mxu0 0.0
    %525 = vmatpush1.msra.mxu0 0.0
    %526 = vmatprep.subr.mxu0 0.0
    %527 = vmatpush1.msra.mxu0 0.0
    %528 = vmatprep.subr.mxu0 0.0
    %529 = vmatpush1.msra.mxu0 0.0
    %530 = vmatprep.subr.mxu0 0.0
    %531 = vmatpush1.msra.mxu0 0.0
    %532 = vmatprep.subr.mxu0 0.0
    %533 = vmatpush1.msra.mxu0 0.0
    %534 = vmatprep.subr.mxu0 0.0
    %535 = vmatpush1.msra.mxu0 0.0
    %536 = vmatprep.subr.mxu0 0.0
    %537 = vmatpush1.msra.mxu0 0.0
    %538 = vmatprep.subr.mxu0 0.0
    %539 = vmatpush1.msra.mxu0 0.0
    %540 = vmatprep.subr.mxu0 0.0
    %541 = vmatpush1.msra.mxu0 %v73
    %542 = vmatprep.subr.mxu0 0.0
    %543 = vmatpush1.msra.mxu0 %v72
    %544 = vmatprep.subr.mxu0 0.0
    %545 = vmatpush1.msra.mxu0 %v71
    %546 = vmatprep.subr.mxu0 0.0
    %547 = vmatpush1.msra.mxu0 %v70
    %548 = vmatprep.subr.mxu0 0.0
    %549 = vmatpush2.msra.mxu0 0.0
    %550 = vmatprep.subr.mxu0 0.0
    %551 = vmatpush2.msra.mxu0 0.0
    %552 = vmatprep.subr.mxu0 0.0
    %553 = vmatpush2.msra.mxu0 0.0
    %554 = vmatprep.subr.mxu0 0.0
    %555 = vmatpush2.msra.mxu0 0.0
    %556 = vmatprep.subr.mxu0 0.0
    %557 = vmatpush2.msra.mxu0 0.0
    %558 = vmatprep.subr.mxu0 0.0
    %559 = vmatpush2.msra.mxu0 0.0
    %560 = vmatprep.subr.mxu0 0.0
    %561 = vmatpush2.msra.mxu0 0.0
    %562 = vmatprep.subr.mxu0 0.0
    %563 = vmatpush2.msra.mxu0 0.0
    %564 = vmatprep.subr.mxu0 0.0
    %565 = vmatpush2.msra.mxu0 0.0
    %566 = vmatprep.subr.mxu0 0.0
    %567 = vmatpush2.msra.mxu0 0.0
    %568 = vmatprep.subr.mxu0 0.0
    %569 = vmatpush2.msra.mxu0 0.0
    %570 = vmatprep.subr.mxu0 0.0
    %571 = vmatpush2.msra.mxu0 0.0
    %572 = vmatprep.subr.mxu0 0.0
    %573 = vmatpush2.msra.mxu0 0.0
    %574 = vmatprep.subr.mxu0 0.0
    %575 = vmatpush2.msra.mxu0 0.0
    %576 = vmatprep.subr.mxu0 0.0
    %577 = vmatpush2.msra.mxu0 0.0
    %578 = vmatprep.subr.mxu0 0.0
    %579 = vmatpush2.msra.mxu0 0.0
    %580 = vmatprep.mubr.f32.mxu0 0.0
    %581 = vmatmul.mubr.f32.gmra.mxu0 %v514
    %v582 = vpop.f32.mrf.mxu0
    %v583 = vadd.f32 %v512, %v582
    %v584 = vpop.f32.mrf.mxu0
    %585 = vdwg.mxu0
    %vm586 = vcmask 23552
    %v587 = vsel %vm586, %v583, -inf
    %588 = vmax.xlane.f32.xlu0 %v587
    %v589 = vpop.xlane.xlu0 %588
    %v590 = vsub.f32 %v583, %v589
    %v591 = vmul.f32 %v590, 1.442695
    %v592 = vpow.pop %v591
    %v593 = vsel %vm586, %v592, 0.0
    %594 = vadd.xlane.f32.xlu0 %v593
    %v595 = vpop.xlane.xlu0 %594
    %v596 = vrcp.pop %v595
    %v597 = vmul.f32 %v592, %v596
    %598 = vst.msk [vmem:[%s3] sm:$0xff] %vm586, %v597
    // Predicated region
    $region18: #{tpu_custom_call.1} parent=1 // pred_check
      _
    $region19: #{tpu_custom_call.1} parent=1 // pred_check_branch
      %600 = sbr.rel (0) target = $region21
    $region20: #{tpu_custom_call.1} parent=1 // pred_region
      _
    $region21: #{tpu_custom_call.1} parent=1 // pred_fallthru
      _
    // Predicated region
    $region22: #{tpu_custom_call.1} parent=1 // pred_check
      _
    $region23: #{tpu_custom_call.1} parent=1 // pred_check_branch
      %602 = sbr.rel (0) target = $region25
    $region24: #{tpu_custom_call.1} parent=1 // pred_region
      _
    $region25: #{tpu_custom_call.1} parent=1 // pred_fallthru
      _
    %603 = vsyncpa [#allocation3], 1

</llo_original>
